<compile_context>
chip_gen: v6e
topology: v6e:2x2x1
jax: 0.10.0
libtpu: 0.0.40
codegen_flags: <defaults>
</compile_context>

<pallas_src>
import functools

import jax
import jax.numpy as jnp
from jax import lax
from jax.experimental import pallas as pl
from jax.experimental.pallas import tpu as pltpu

IN_F, H1_F, H2_F, OUT_F = 10, 64, 32, 1

MAX_TILE_B = 32768   # lanes; keeps double-buffered x/out tiles ~3 MiB of VMEM
CHUNK_B = 512        # inner lane sub-chunk bounding h1/h2 scratch


def _round_up(n, m):
    return ((n + m - 1) // m) * m


def mlp_kernel(x_ref, w1_ref, b1_ref, w2_ref, b2_ref, w3_ref, b3_ref, o_ref,
               *, chunk, n_chunks):
    # Weights/biases are tiny and resident in VMEM (constant index_maps);
    # hoist the loads out of the chunk loop.
    w1 = w1_ref[...]   # (64, 10) bf16
    b1 = b1_ref[...]   # (64, 1)  f32
    w2 = w2_ref[...]   # (32, 64) bf16
    b2 = b2_ref[...]   # (32, 1)  f32
    w3 = w3_ref[...]   # (32, 1)  f32   (layer-3 weight as a column)
    b3 = b3_ref[...]   # (1, 1)   f32

    def body(c, carry):
        start = pl.multiple_of(c * chunk, chunk)
        # (chunk, 10) slice of the batch tile; bf16 operands for the MXU.
        xc = x_ref[pl.ds(start, chunk), :].astype(jnp.bfloat16)

        # Layer 1 + ReLU: contract the feature axis of both operands
        # (W1 (64,10) x xc (chunk,10) -> (64, chunk)); batch stays on lanes.
        h1 = lax.dot_general(w1, xc, (((1,), (1,)), ((), ())),
                             preferred_element_type=jnp.float32)
        h1 = jnp.maximum(h1 + b1, 0.0).astype(jnp.bfloat16)

        # Layer 2 + ReLU: (32,64) @ (64,chunk) -> (32,chunk), f32 accumulate.
        h2 = jnp.dot(w2, h1, preferred_element_type=jnp.float32)
        h2 = jnp.maximum(h2 + b2, 0.0)

        # Layer 3 (out_features = 1): VPU multiply + sublane reduction instead
        # of a nearly empty MXU pass; lane-dense (1, chunk) store.
        out = jnp.sum(h2 * w3, axis=0, keepdims=True) + b3
        o_ref[:, pl.ds(start, chunk)] = out.astype(o_ref.dtype)
        return carry

    lax.fori_loop(0, n_chunks, body, 0, unroll=min(8, n_chunks))


@functools.partial(jax.jit, static_argnames=("tile_b",))
def simple_nn_forward(x, params, tile_b=None):
    """Fused SimpleNN forward pass. x: (B, 10) float32 -> (B, 1) float32."""
    w1, b1, w2, b2, w3, b3 = params   # PyTorch layout: w (out, in), b (out,)
    B = x.shape[0]

    # ---- static tile selection (trace time) --------------------------------
    if tile_b is None:
        b_aligned = _round_up(B, 128)
        if b_aligned <= CHUNK_B:
            tb = b_aligned                               # one small tile
        else:
            # >= 2 grid steps so ("parallel",) shards across v7x's two TCs;
            # capped so tiles stay well under every generation's scoped VMEM.
            tb = min(MAX_TILE_B, _round_up(pl.cdiv(b_aligned, 2), CHUNK_B))
    else:
        tb = _round_up(int(tile_b), 128)
    chunk = CHUNK_B
    while tb % chunk:          # tb is a multiple of 128, so this terminates
        chunk //= 2
    n_chunks = tb // chunk

    n_tiles = pl.cdiv(B, tb)
    B_pad = n_tiles * tb

    # Zero-pad the batch tail only (no transpose, no materialized copy when B
    # is already tile-aligned; padded rows are sliced off below).
    x32 = x.astype(jnp.float32)
    x_pad = jnp.pad(x32, ((0, B_pad - B), (0, 0))) if B_pad != B else x32

    # Weights in bf16 for the MXU; biases / layer-3 column stay f32.
    w1b = w1.astype(jnp.bfloat16)
    w2b = w2.astype(jnp.bfloat16)
    b1c = b1.reshape(H1_F, 1).astype(jnp.float32)
    b2c = b2.reshape(H2_F, 1).astype(jnp.float32)
    w3c = w3.reshape(OUT_F, H2_F).T.astype(jnp.float32)   # (32, 1)
    b3c = b3.reshape(OUT_F, 1).astype(jnp.float32)

    weight_bytes = 2 * (w1.size + w2.size) + 4 * (b1.size + b2.size + w3.size + b3.size)
    cost = pl.CostEstimate(
        flops=2 * B_pad * (IN_F * H1_F + H1_F * H2_F + H2_F * OUT_F),
        transcendentals=0,
        bytes_accessed=B_pad * 4 * (IN_F + OUT_F) + weight_bytes,
    )

    kernel = functools.partial(mlp_kernel, chunk=chunk, n_chunks=n_chunks)

    in_specs = [
        # x tile in natural (batch, feature) layout; streamed over the grid.
        pl.BlockSpec((tb, IN_F), lambda i: (i, 0)),
        # Weights / biases: constant index_map -> resident in VMEM, no re-DMA.
        pl.BlockSpec((H1_F, IN_F), lambda i: (0, 0)),
        pl.BlockSpec((H1_F, 1), lambda i: (0, 0)),
        pl.BlockSpec((H2_F, H1_F), lambda i: (0, 0)),
        pl.BlockSpec((H2_F, 1), lambda i: (0, 0)),
        pl.BlockSpec((H2_F, 1), lambda i: (0, 0)),
        pl.BlockSpec((OUT_F, 1), lambda i: (0, 0)),
    ]
    out_specs = pl.BlockSpec((OUT_F, tb), lambda i: (0, i))

    outT = pl.pallas_call(
        kernel,
        out_shape=jax.ShapeDtypeStruct((OUT_F, B_pad), jnp.float32),
        grid=(n_tiles,),
        in_specs=in_specs,
        out_specs=out_specs,
        compiler_params=pltpu.CompilerParams(
            dimension_semantics=("parallel",),
        ),
        cost_estimate=cost,
    )(x_pad, w1b, b1c, w2b, b2c, w3c, b3c)

    # (1, B_pad) -> (B, 1); zero-padded tail rows dropped.
    return outT[:, :B].T


def init_params(key):
    """PyTorch nn.Linear-style init. Weights (out,in), biases (out,)."""
    def linear(key, fan_in, fan_out):
        kw, kb = jax.random.split(key)
        bound = 1.0 / jnp.sqrt(fan_in)
        w = jax.random.uniform(kw, (fan_out, fan_in), jnp.float32, -bound, bound)
        b = jax.random.uniform(kb, (fan_out,), jnp.float32, -bound, bound)
        return w, b

    k1, k2, k3 = jax.random.split(key, 3)
    w1, b1 = linear(k1, IN_F, H1_F)
    w2, b2 = linear(k2, H1_F, H2_F)
    w3, b3 = linear(k3, H2_F, OUT_F)
    return (w1, b1, w2, b2, w3, b3)


def reference_forward_f32(x, params):
    w1, b1, w2, b2, w3, b3 = params
    h = jnp.maximum(x @ w1.T + b1, 0.0)
    h = jnp.maximum(h @ w2.T + b2, 0.0)
    return h @ w3.T + b3


def reference_forward_bf16(x, params):
    """Mirrors kernel precision: bf16 matmul operands, f32 accumulate/epilogue."""
    w1, b1, w2, b2, w3, b3 = params
    up = lambda a: a.astype(jnp.bfloat16).astype(jnp.float32)
    h = jnp.maximum(up(x) @ up(w1).T + b1, 0.0)
    h = jnp.maximum(up(h) @ up(w2).T + b2, 0.0)
    return h @ w3.T + b3


def _check(x, params, tile_b=None, tag=""):
    out = jax.block_until_ready(simple_nn_forward(x, params, tile_b=tile_b))
    assert out.shape == (x.shape[0], OUT_F), (tag, out.shape)
    ref_bf16 = reference_forward_bf16(x, params)
    ref_f32 = reference_forward_f32(x, params)
    assert jnp.allclose(out, ref_bf16, atol=2e-3, rtol=2e-3), f"mismatch vs bf16 ref ({tag})"
    assert jnp.allclose(out, ref_f32, atol=5e-2, rtol=5e-2), f"mismatch vs f32 ref ({tag})"


if __name__ == "__main__":
    key = jax.random.PRNGKey(0)
    kp, k1, k2, k3 = jax.random.split(key, 4)
    params = init_params(kp)

    # Small batch: single padded 128-lane tile.
    x_small = jax.random.normal(k1, (8, IN_F), jnp.float32)
    _check(x_small, params, tag="small")

    # Non-multiple batch with explicit small tile: multi-step grid + padded tail.
    x_mid = jax.random.normal(k2, (549, IN_F), jnp.float32)
    _check(x_mid, params, tile_b=256, tag="multi-tile")

    # Auto-picked tile: 2 grid steps (megacore path) + in-kernel chunk loop (>1 chunk).
    x_big = jax.random.normal(k3, (1530, IN_F), jnp.float32)
    _check(x_big, params, tag="auto-tile")

    print("KERNEL_OK")
</pallas_src>

<mosaic_0001>
module attributes {stable_mosaic.version = 11 : i64} {
  func.func @mlp_kernel(%arg0: i32, %arg1: memref<128x10xf32, #tpu.memory_space<vmem>>, %arg2: memref<64x10xbf16, #tpu.memory_space<vmem>>, %arg3: memref<64x1xf32, #tpu.memory_space<vmem>>, %arg4: memref<32x64xbf16, #tpu.memory_space<vmem>>, %arg5: memref<32x1xf32, #tpu.memory_space<vmem>>, %arg6: memref<32x1xf32, #tpu.memory_space<vmem>>, %arg7: memref<1x1xf32, #tpu.memory_space<vmem>>, %arg8: memref<1x128xf32, #tpu.memory_space<vmem>>) attributes {dimension_semantics = [#tpu.dimension_semantics<parallel>], iteration_bounds = array<i64: 1>, scalar_prefetch = 0 : i64, scratch_operands = 0 : i64, tpu.core_type = #tpu.core_type<tc>, window_params = [{transform_indices = @transform_0, window_bounds = array<i64: 128, 10>}, {pipeline_mode = #tpu.pipeline_mode<synchronous>, transform_indices = @transform_1, window_bounds = array<i64: 64, 10>}, {pipeline_mode = #tpu.pipeline_mode<synchronous>, transform_indices = @transform_2, window_bounds = array<i64: 64, 1>}, {pipeline_mode = #tpu.pipeline_mode<synchronous>, transform_indices = @transform_3, window_bounds = array<i64: 32, 64>}, {pipeline_mode = #tpu.pipeline_mode<synchronous>, transform_indices = @transform_4, window_bounds = array<i64: 32, 1>}, {pipeline_mode = #tpu.pipeline_mode<synchronous>, transform_indices = @transform_5, window_bounds = array<i64: 32, 1>}, {pipeline_mode = #tpu.pipeline_mode<synchronous>, transform_indices = @transform_6, window_bounds = array<i64: 1, 1>}, {transform_indices = @transform_7, window_bounds = array<i64: 1, 128>}]} {
    %c0 = arith.constant 0 : index
    %c0_0 = arith.constant 0 : index
    %0 = vector.load %arg2[%c0, %c0_0] : memref<64x10xbf16, #tpu.memory_space<vmem>>, vector<64x10xbf16>
    %c0_1 = arith.constant 0 : index
    %c0_2 = arith.constant 0 : index
    %1 = vector.load %arg3[%c0_1, %c0_2] : memref<64x1xf32, #tpu.memory_space<vmem>>, vector<64x1xf32>
    %c0_3 = arith.constant 0 : index
    %c0_4 = arith.constant 0 : index
    %2 = vector.load %arg4[%c0_3, %c0_4] : memref<32x64xbf16, #tpu.memory_space<vmem>>, vector<32x64xbf16>
    %c0_5 = arith.constant 0 : index
    %c0_6 = arith.constant 0 : index
    %3 = vector.load %arg5[%c0_5, %c0_6] : memref<32x1xf32, #tpu.memory_space<vmem>>, vector<32x1xf32>
    %c0_7 = arith.constant 0 : index
    %c0_8 = arith.constant 0 : index
    %4 = vector.load %arg6[%c0_7, %c0_8] : memref<32x1xf32, #tpu.memory_space<vmem>>, vector<32x1xf32>
    %c0_9 = arith.constant 0 : index
    %c0_10 = arith.constant 0 : index
    %5 = vector.load %arg7[%c0_9, %c0_10] : memref<1x1xf32, #tpu.memory_space<vmem>>, vector<1x1xf32>
    %c0_i32 = arith.constant 0 : i32
    %c128_i32 = arith.constant 128 : i32
    %6 = arith.muli %c0_i32, %c128_i32 : i32
    %7 = tpu.assume_multiple %6, 128 : i32
    %8 = arith.index_cast %7 : i32 to index
    %c0_11 = arith.constant 0 : index
    %9 = vector.load %arg1[%8, %c0_11] : memref<128x10xf32, #tpu.memory_space<vmem>>, vector<128x10xf32>
    %10 = arith.truncf %9 : vector<128x10xf32> to vector<128x10xbf16>
    %cst = arith.constant dense<0.000000e+00> : vector<64x128xf32>
    %11 = tpu.matmul %0, %10, %cst {dimension_numbers = #tpu.dot_dimension_numbers<[1], [1], [0], [0], [0, 0, 1, 0], [], []>} : vector<64x10xbf16>, vector<128x10xbf16>, vector<64x128xf32> -> vector<64x128xf32>
    %12 = vector.broadcast %1 : vector<64x1xf32> to vector<64x128xf32>
    %13 = arith.addf %11, %12 : vector<64x128xf32>
    %cst_12 = arith.constant 0.000000e+00 : f32
    %14 = vector.broadcast %cst_12 : f32 to vector<64x128xf32>
    %15 = arith.maximumf %13, %14 : vector<64x128xf32>
    %16 = arith.truncf %15 : vector<64x128xf32> to vector<64x128xbf16>
    %cst_13 = arith.constant dense<0.000000e+00> : vector<32x128xf32>
    %17 = tpu.matmul %2, %16, %cst_13 {dimension_numbers = #tpu.dot_dimension_numbers<[1], [0], [0], [1], [0, 0, 1, 1], [], []>} : vector<32x64xbf16>, vector<64x128xbf16>, vector<32x128xf32> -> vector<32x128xf32>
    %18 = vector.broadcast %3 : vector<32x1xf32> to vector<32x128xf32>
    %19 = arith.addf %17, %18 : vector<32x128xf32>
    %cst_14 = arith.constant 0.000000e+00 : f32
    %20 = vector.broadcast %cst_14 : f32 to vector<32x128xf32>
    %21 = arith.maximumf %19, %20 : vector<32x128xf32>
    %22 = vector.broadcast %4 : vector<32x1xf32> to vector<32x128xf32>
    %23 = arith.mulf %21, %22 : vector<32x128xf32>
    %cst_15 = arith.constant dense<0.000000e+00> : vector<128xf32>
    %24 = vector.multi_reduction <add>, %23, %cst_15 [0] : vector<32x128xf32> to vector<128xf32>
    %25 = vector.shape_cast %24 : vector<128xf32> to vector<1x128xf32>
    %26 = vector.broadcast %5 : vector<1x1xf32> to vector<1x128xf32>
    %27 = arith.addf %25, %26 : vector<1x128xf32>
    %c0_16 = arith.constant 0 : index
    %28 = arith.index_cast %7 : i32 to index
    %29 = vector.load %arg8[%c0_16, %28] : memref<1x128xf32, #tpu.memory_space<vmem>>, vector<1x128xf32>
    tpu.vector_store %arg8[%c0_16, %28], %27 {strides = array<i32>} : memref<1x128xf32, #tpu.memory_space<vmem>>, vector<1x128xf32>,
    %c1_i32 = arith.constant 1 : i32
    return
  }
  func.func @transform_0(%arg0: i32) -> (i32, i32) {
    %c0_i32 = arith.constant 0 : i32
    %c0_i32_0 = arith.constant 0 : i32
    return %arg0, %c0_i32 : i32, i32
  }
  func.func @transform_1(%arg0: i32) -> (i32, i32) {
    %c0_i32 = arith.constant 0 : i32
    %c0_i32_0 = arith.constant 0 : i32
    %c0_i32_1 = arith.constant 0 : i32
    return %c0_i32, %c0_i32_0 : i32, i32
  }
  func.func @transform_2(%arg0: i32) -> (i32, i32) {
    %c0_i32 = arith.constant 0 : i32
    %c0_i32_0 = arith.constant 0 : i32
    %c0_i32_1 = arith.constant 0 : i32
    return %c0_i32, %c0_i32_0 : i32, i32
  }
  func.func @transform_3(%arg0: i32) -> (i32, i32) {
    %c0_i32 = arith.constant 0 : i32
    %c0_i32_0 = arith.constant 0 : i32
    %c0_i32_1 = arith.constant 0 : i32
    return %c0_i32, %c0_i32_0 : i32, i32
  }
  func.func @transform_4(%arg0: i32) -> (i32, i32) {
    %c0_i32 = arith.constant 0 : i32
    %c0_i32_0 = arith.constant 0 : i32
    %c0_i32_1 = arith.constant 0 : i32
    return %c0_i32, %c0_i32_0 : i32, i32
  }
  func.func @transform_5(%arg0: i32) -> (i32, i32) {
    %c0_i32 = arith.constant 0 : i32
    %c0_i32_0 = arith.constant 0 : i32
    %c0_i32_1 = arith.constant 0 : i32
    return %c0_i32, %c0_i32_0 : i32, i32
  }
  func.func @transform_6(%arg0: i32) -> (i32, i32) {
    %c0_i32 = arith.constant 0 : i32
    %c0_i32_0 = arith.constant 0 : i32
    %c0_i32_1 = arith.constant 0 : i32
    return %c0_i32, %c0_i32_0 : i32, i32
  }
  func.func @transform_7(%arg0: i32) -> (i32, i32) {
    %c0_i32 = arith.constant 0 : i32
    %c0_i32_0 = arith.constant 0 : i32
    return %c0_i32, %arg0 : i32, i32
  }
}

</mosaic_0001>

<llo_original>
// kernel: simple_nn_forward.1
$region0: #{simple_nn_forward.1}
  #allocation0 [shape = 'u32[]', space=smem, size = 0x4, offset = 0x4, fixed_abs, tag = 'smem constant byte address 0x4 - core index']
  #allocation1 [shape = 'u32[144,128]{1,0:T(1,128)}', space=vmem, size = 0x12000, scoped, tag = 'internal scratch']
  #allocation2 [shape = 'f32[1,1]{1,0:T(1,128)S(1)}', space=vmem, size = 0x200, scoped, tag = 'scoped memory for simple_nn_forward.1']
  %s0 = inlined_call_operand.vmem [shape: f32[128,10], index: 0, kind: input, shape index: {}]
  %s1 = inlined_call_operand.vmem [shape: bf16[64,10], index: 1, kind: input, shape index: {}]
  %s2 = inlined_call_operand.vmem [shape: f32[64,1], index: 2, kind: input, shape index: {}]
  %s3 = inlined_call_operand.vmem [shape: bf16[32,64], index: 3, kind: input, shape index: {}]
  %s4 = inlined_call_operand.vmem [shape: f32[32,1], index: 4, kind: input, shape index: {}]
  %s5 = inlined_call_operand.vmem [shape: f32[32,1], index: 5, kind: input, shape index: {}]
  %s6 = inlined_call_operand.<no memory space> [shape: f32[1,1], index: 6, kind: input, shape index: {}]
  %s7 = inlined_call_operand.vmem [shape: f32[1,128], index: 7, kind: output, shape index: {}]
  %s8 = sld [smem:[#allocation0]]
  $region38: #{simple_nn_forward.1} parent=0
    _
  %s10 = ssub.s32 1, %s8
  %s11 = scalar_select 0, %s10, %s8
  %v12 = vstv %s6
  %13 = vst [vmem:[#allocation2] sm:$0x1] %v12
  // Predicated region
  $region2: #{simple_nn_forward.1} parent=0 // pred_check
    _
  $region3: #{simple_nn_forward.1} parent=0 // pred_check_branch
    %15 = sbr.rel (0) target = $region5
  $region4: #{simple_nn_forward.1} parent=0 // pred_region
    _
  $region5: #{simple_nn_forward.1} parent=0 // pred_fallthru
    _
  // Predicated region
  $region6: #{simple_nn_forward.1} parent=0 // pred_check
    _
  $region7: #{simple_nn_forward.1} parent=0 // pred_check_branch
    %17 = sbr.rel (0) target = $region9
  $region8: #{simple_nn_forward.1} parent=0 // pred_region
    _
  $region9: #{simple_nn_forward.1} parent=0 // pred_fallthru
    _
  // Predicated region
  $region10: #{simple_nn_forward.1} parent=0 // pred_check
    _
  $region11: #{simple_nn_forward.1} parent=0 // pred_check_branch
    %19 = sbr.rel (0) target = $region13
  $region12: #{simple_nn_forward.1} parent=0 // pred_region
    _
  $region13: #{simple_nn_forward.1} parent=0 // pred_fallthru
    _
  // Predicated region
  $region14: #{simple_nn_forward.1} parent=0 // pred_check
    _
  $region15: #{simple_nn_forward.1} parent=0 // pred_check_branch
    %21 = sbr.rel (0) target = $region17
  $region16: #{simple_nn_forward.1} parent=0 // pred_region
    _
  $region17: #{simple_nn_forward.1} parent=0 // pred_fallthru
    _
  // Predicated region
  $region18: #{simple_nn_forward.1} parent=0 // pred_check
    _
  $region19: #{simple_nn_forward.1} parent=0 // pred_check_branch
    %23 = sbr.rel (0) target = $region21
  $region20: #{simple_nn_forward.1} parent=0 // pred_region
    _
  $region21: #{simple_nn_forward.1} parent=0 // pred_fallthru
    _
  // Predicated region
  $region22: #{simple_nn_forward.1} parent=0 // pred_check
    _
  $region23: #{simple_nn_forward.1} parent=0 // pred_check_branch
    %25 = sbr.rel (0) target = $region25
  $region24: #{simple_nn_forward.1} parent=0 // pred_region
    _
  $region25: #{simple_nn_forward.1} parent=0 // pred_fallthru
    _
  // Predicated region
  $region26: #{simple_nn_forward.1} parent=0 // pred_check
    _
  $region27: #{simple_nn_forward.1} parent=0 // pred_check_branch
    %27 = sbr.rel (0) target = $region29
  $region28: #{simple_nn_forward.1} parent=0 // pred_region
    _
  $region29: #{simple_nn_forward.1} parent=0 // pred_fallthru
    _
  %v29 = vld [vmem:[%s1] sm:$0xf]
  %v30 = vld [vmem:[%s1 + $0x4] sm:$0xf]
  %v31 = vld [vmem:[%s1 + $0x8] sm:$0xf]
  %v32 = vld [vmem:[%s1 + $0xc] sm:$0xf]
  %v33 = vld [vmem:[%s1 + $0x10] sm:$0xf]
  %v34 = vld [vmem:[%s1 + $0x14] sm:$0xf]
  %v35 = vld [vmem:[%s1 + $0x18] sm:$0xf]
  %v36 = vld [vmem:[%s1 + $0x1c] sm:$0xf]
  %v37 = vld [vmem:[%s2] sm:$0xff]
  %v38 = vld [vmem:[%s2 + $0x8] sm:$0xff]
  %v39 = vld [vmem:[%s2 + $0x10] sm:$0xff]
  %v40 = vld [vmem:[%s2 + $0x18] sm:$0xff]
  %v41 = vld [vmem:[%s2 + $0x20] sm:$0xff]
  %v42 = vld [vmem:[%s2 + $0x28] sm:$0xff]
  %v43 = vld [vmem:[%s2 + $0x30] sm:$0xff]
  %v44 = vld [vmem:[%s2 + $0x38] sm:$0xff]
  %v45 = vld [vmem:[%s3] sm:$0xf]
  %v46 = vld [vmem:[%s3 + $0x4] sm:$0xf]
  %v47 = vld [vmem:[%s3 + $0x8] sm:$0xf]
  %v48 = vld [vmem:[%s3 + $0xc] sm:$0xf]
  %v49 = vld [vmem:[%s4] sm:$0xff]
  %v50 = vld [vmem:[%s4 + $0x8] sm:$0xff]
  %v51 = vld [vmem:[%s4 + $0x10] sm:$0xff]
  %v52 = vld [vmem:[%s4 + $0x18] sm:$0xff]
  %v53 = vld [vmem:[%s5] sm:$0xff]
  %v54 = vld [vmem:[%s5 + $0x8] sm:$0xff]
  %v55 = vld [vmem:[%s5 + $0x10] sm:$0xff]
  %v56 = vld [vmem:[%s5 + $0x18] sm:$0xff]
  %v57 = vld [vmem:[#allocation2] sm:$0x1]
  %v58 = vld [vmem:[%s0] sm:$0xff]
  %v59 = vld [vmem:[%s0 + $0x8] sm:$0xff]
  %v60 = vld [vmem:[%s0 + $0x10] sm:$0xff]
  %v61 = vld [vmem:[%s0 + $0x18] sm:$0xff]
  %v62 = vld [vmem:[%s0 + $0x20] sm:$0xff]
  %v63 = vld [vmem:[%s0 + $0x28] sm:$0xff]
  %v64 = vld [vmem:[%s0 + $0x30] sm:$0xff]
  %v65 = vld [vmem:[%s0 + $0x38] sm:$0xff]
  %v66 = vld [vmem:[%s0 + $0x40] sm:$0xff]
  %v67 = vld [vmem:[%s0 + $0x48] sm:$0xff]
  %v68 = vld [vmem:[%s0 + $0x50] sm:$0xff]
  %v69 = vld [vmem:[%s0 + $0x58] sm:$0xff]
  %v70 = vld [vmem:[%s0 + $0x60] sm:$0xff]
  %v71 = vld [vmem:[%s0 + $0x68] sm:$0xff]
  %v72 = vld [vmem:[%s0 + $0x70] sm:$0xff]
  %v73 = vld [vmem:[%s0 + $0x78] sm:$0xff]
  %v74 = vpack.c.bf16 %v59, %v58
  %v75 = vpack.c.bf16 %v61, %v60
  %v76 = vpack.c.bf16 %v63, %v62
  %v77 = vpack.c.bf16 %v65, %v64
  %v78 = vpack.c.bf16 %v67, %v66
  %v79 = vpack.c.bf16 %v69, %v68
  %v80 = vpack.c.bf16 %v71, %v70
  %v81 = vpack.c.bf16 %v73, %v72
  %83 = vset.pattern.permute.xlu0 0
  %84 = vperm.xlu0 %83, %v37
  %v85 = vpop.permute.xlu0 %84
  %88 = vset.pattern.permute.xlu0 0
  %89 = vperm.xlu0 %88, %v38
  %v90 = vpop.permute.xlu0 %89
  %93 = vset.pattern.permute.xlu0 0
  %94 = vperm.xlu0 %93, %v39
  %v95 = vpop.permute.xlu0 %94
  %98 = vset.pattern.permute.xlu0 0
  %99 = vperm.xlu0 %98, %v40
  %v100 = vpop.permute.xlu0 %99
  %103 = vset.pattern.permute.xlu0 0
  %104 = vperm.xlu0 %103, %v41
  %v105 = vpop.permute.xlu0 %104
  %108 = vset.pattern.permute.xlu0 0
  %109 = vperm.xlu0 %108, %v42
  %v110 = vpop.permute.xlu0 %109
  %113 = vset.pattern.permute.xlu0 0
  %114 = vperm.xlu0 %113, %v43
  %v115 = vpop.permute.xlu0 %114
  %118 = vset.pattern.permute.xlu0 0
  %119 = vperm.xlu0 %118, %v44
  %v120 = vpop.permute.xlu0 %119
  %v130 = vunpack.c.l.b16 %v29
  %v131 = vunpack.c.l.b16 %v30
  %v132 = vunpack.c.l.b16 %v31
  %v133 = vunpack.c.l.b16 %v32
  %v134 = vunpack.c.l.b16 %v33
  %v135 = vunpack.c.l.b16 %v34
  %v136 = vunpack.c.l.b16 %v35
  %v137 = vunpack.c.l.b16 %v36
  %v138 = vpack.c.b16 %v131, %v130
  %v139 = vpack.c.b16 %v133, %v132
  %v140 = vpack.c.b16 %v135, %v134
  %v141 = vpack.c.b16 %v137, %v136
  %vm142 = vcmask 80896
  %v144 = vsel %vm142, %v138, 0
  %v147 = vsel %vm142, %v139, 0
  %v150 = vsel %vm142, %v140, 0
  %v153 = vsel %vm142, %v141, 0
  %v156 = vsel %vm142, %v74, 0
  %v159 = vsel %vm142, %v75, 0
  %v162 = vsel %vm142, %v76, 0
  %v165 = vsel %vm142, %v77, 0
  %v168 = vsel %vm142, %v78, 0
  %v171 = vsel %vm142, %v79, 0
  %v174 = vsel %vm142, %v80, 0
  %v177 = vsel %vm142, %v81, 0
  %179 = vmatprep.subr.bf16.mxu0 0
  %180 = vmatpush1.bf16.xpose.msra.mxu0 %v177
  %181 = vmatprep.subr.bf16.mxu0 0
  %182 = vmatpush1.bf16.xpose.msra.mxu0 %v174
  %183 = vmatprep.subr.bf16.mxu0 0
  %184 = vmatpush1.bf16.xpose.msra.mxu0 %v171
  %185 = vmatprep.subr.bf16.mxu0 0
  %186 = vmatpush1.bf16.xpose.msra.mxu0 %v168
  %187 = vmatprep.subr.bf16.mxu0 0
  %188 = vmatpush1.bf16.xpose.msra.mxu0 %v165
  %189 = vmatprep.subr.bf16.mxu0 0
  %190 = vmatpush1.bf16.xpose.msra.mxu0 %v162
  %191 = vmatprep.subr.bf16.mxu0 0
  %192 = vmatpush1.bf16.xpose.msra.mxu0 %v159
  %193 = vmatprep.subr.bf16.mxu0 0
  %194 = vmatpush1.bf16.xpose.msra.mxu0 %v156
  %195 = vmatprep.subr.bf16.mxu0 0
  %196 = vmatpush2.bf16.xpose.msra.mxu0 0
  %197 = vmatprep.subr.bf16.mxu0 0
  %198 = vmatpush2.bf16.xpose.msra.mxu0 0
  %199 = vmatprep.subr.bf16.mxu0 0
  %200 = vmatpush2.bf16.xpose.msra.mxu0 0
  %201 = vmatprep.subr.bf16.mxu0 0
  %202 = vmatpush2.bf16.xpose.msra.mxu0 0
  %203 = vmatprep.subr.bf16.mxu0 0
  %204 = vmatpush2.bf16.xpose.msra.mxu0 0
  %205 = vmatprep.subr.bf16.mxu0 0
  %206 = vmatpush2.bf16.xpose.msra.mxu0 0
  %207 = vmatprep.subr.bf16.mxu0 0
  %208 = vmatpush2.bf16.xpose.msra.mxu0 0
  %209 = vmatprep.subr.bf16.mxu0 0
  %210 = vmatpush2.bf16.xpose.msra.mxu0 0
  %211 = vmatprep.mubr.bf16.mxu0 0
  %212 = vmatmul.mubr.bf16.gmra.mxu0 %v144
  %v213 = vpop.f32.mrf.mxu0
  %v214 = vadd.f32 %v85, %v213
  %v215 = vpop.f32.mrf.mxu0
  %v216 = vpop.f32.mrf.mxu0
  %v217 = vadd.f32 %v90, %v216
  %v218 = vpop.f32.mrf.mxu0
  %219 = vmatprep.mubr.bf16.mxu0 0
  %220 = vmatmul.mubr.bf16.gmra.mxu0 %v147
  %v221 = vpop.f32.mrf.mxu0
  %v222 = vadd.f32 %v95, %v221
  %v223 = vpop.f32.mrf.mxu0
  %v224 = vpop.f32.mrf.mxu0
  %v225 = vadd.f32 %v100, %v224
  %v226 = vpop.f32.mrf.mxu0
  %227 = vmatprep.mubr.bf16.mxu0 0
  %228 = vmatmul.mubr.bf16.gmra.mxu0 %v150
  %v229 = vpop.f32.mrf.mxu0
  %v230 = vadd.f32 %v105, %v229
  %v231 = vpop.f32.mrf.mxu0
  %v232 = vpop.f32.mrf.mxu0
  %v233 = vadd.f32 %v110, %v232
  %v234 = vpop.f32.mrf.mxu0
  %235 = vmatprep.mubr.bf16.mxu0 0
  %236 = vmatmul.mubr.bf16.gmra.mxu0 %v153
  %v237 = vpop.f32.mrf.mxu0
  %v238 = vadd.f32 %v115, %v237
  %v239 = vpop.f32.mrf.mxu0
  %v240 = vpop.f32.mrf.mxu0
  %v241 = vadd.f32 %v120, %v240
  %v242 = vpop.f32.mrf.mxu0
  %243 = vdwg.mxu0
  %v244 = vmax.f32 %v214, 0.0
  %v245 = vmax.f32 %v217, 0.0
  %v246 = vmax.f32 %v222, 0.0
  %v247 = vmax.f32 %v225, 0.0
  %v248 = vmax.f32 %v230, 0.0
  %v249 = vmax.f32 %v233, 0.0
  %v250 = vmax.f32 %v238, 0.0
  %v251 = vmax.f32 %v241, 0.0
  %v252 = vpack.c.bf16 %v245, %v244
  %v253 = vpack.c.bf16 %v247, %v246
  %v254 = vpack.c.bf16 %v249, %v248
  %v255 = vpack.c.bf16 %v251, %v250
  %257 = vset.pattern.permute.xlu0 0
  %258 = vperm.xlu0 %257, %v49
  %v259 = vpop.permute.xlu0 %258
  %262 = vset.pattern.permute.xlu0 0
  %263 = vperm.xlu0 %262, %v50
  %v264 = vpop.permute.xlu0 %263
  %267 = vset.pattern.permute.xlu0 0
  %268 = vperm.xlu0 %267, %v51
  %v269 = vpop.permute.xlu0 %268
  %272 = vset.pattern.permute.xlu0 0
  %273 = vperm.xlu0 %272, %v52
  %v274 = vpop.permute.xlu0 %273
  %v280 = vunpack.c.l.b16 %v45
  %v281 = vunpack.c.l.b16 %v46
  %v282 = vunpack.c.l.b16 %v47
  %v283 = vunpack.c.l.b16 %v48
  %v284 = vpack.c.b16 %v281, %v280
  %v285 = vpack.c.b16 %v283, %v282
  %vm286 = vcmask 523264
  %v288 = vsel %vm286, %v284, 0
  %v291 = vsel %vm286, %v285, 0
  %293 = vmatprep.subr.bf16.mxu0 0
  %294 = vmatpush1.bf16.msra.mxu0 0
  %295 = vmatprep.subr.bf16.mxu0 0
  %296 = vmatpush1.bf16.msra.mxu0 0
  %297 = vmatprep.subr.bf16.mxu0 0
  %298 = vmatpush1.bf16.msra.mxu0 0
  %299 = vmatprep.subr.bf16.mxu0 0
  %300 = vmatpush1.bf16.msra.mxu0 0
  %301 = vmatprep.subr.bf16.mxu0 0
  %302 = vmatpush1.bf16.msra.mxu0 %v255
  %303 = vmatprep.subr.bf16.mxu0 0
  %304 = vmatpush1.bf16.msra.mxu0 %v254
  %305 = vmatprep.subr.bf16.mxu0 0
  %306 = vmatpush1.bf16.msra.mxu0 %v253
  %307 = vmatprep.subr.bf16.mxu0 0
  %308 = vmatpush1.bf16.msra.mxu0 %v252
  %309 = vmatprep.subr.bf16.mxu0 0
  %310 = vmatpush2.bf16.msra.mxu0 0
  %311 = vmatprep.subr.bf16.mxu0 0
  %312 = vmatpush2.bf16.msra.mxu0 0
  %313 = vmatprep.subr.bf16.mxu0 0
  %314 = vmatpush2.bf16.msra.mxu0 0
  %315 = vmatprep.subr.bf16.mxu0 0
  %316 = vmatpush2.bf16.msra.mxu0 0
  %317 = vmatprep.subr.bf16.mxu0 0
  %318 = vmatpush2.bf16.msra.mxu0 0
  %319 = vmatprep.subr.bf16.mxu0 0
  %320 = vmatpush2.bf16.msra.mxu0 0
  %321 = vmatprep.subr.bf16.mxu0 0
  %322 = vmatpush2.bf16.msra.mxu0 0
  %323 = vmatprep.subr.bf16.mxu0 0
  %324 = vmatpush2.bf16.msra.mxu0 0
  %325 = vmatprep.mubr.bf16.mxu0 0
  %326 = vmatmul.mubr.bf16.gmra.mxu0 %v288
  %v327 = vpop.f32.mrf.mxu0
  %v328 = vadd.f32 %v259, %v327
  %v329 = vpop.f32.mrf.mxu0
  %v330 = vpop.f32.mrf.mxu0
  %v331 = vadd.f32 %v264, %v330
  %v332 = vpop.f32.mrf.mxu0
  %333 = vmatprep.mubr.bf16.mxu0 0
  %334 = vmatmul.mubr.bf16.gmra.mxu0 %v291
  %v335 = vpop.f32.mrf.mxu0
  %v336 = vadd.f32 %v269, %v335
  %v337 = vpop.f32.mrf.mxu0
  %v338 = vpop.f32.mrf.mxu0
  %v339 = vadd.f32 %v274, %v338
  %v340 = vpop.f32.mrf.mxu0
  %341 = vdwg.mxu0
  %v342 = vmax.f32 %v328, 0.0
  %v343 = vmax.f32 %v331, 0.0
  %v344 = vmax.f32 %v336, 0.0
  %v345 = vmax.f32 %v339, 0.0
  %347 = vset.pattern.permute.xlu0 0
  %348 = vperm.xlu0 %347, %v53
  %v349 = vpop.permute.xlu0 %348
  %352 = vset.pattern.permute.xlu0 0
  %353 = vperm.xlu0 %352, %v54
  %v354 = vpop.permute.xlu0 %353
  %357 = vset.pattern.permute.xlu0 0
  %358 = vperm.xlu0 %357, %v55
  %v359 = vpop.permute.xlu0 %358
  %362 = vset.pattern.permute.xlu0 0
  %363 = vperm.xlu0 %362, %v56
  %v364 = vpop.permute.xlu0 %363
  %v366 = vmul.f32 %v342, %v349
  %v367 = vmul.f32 %v343, %v354
  %v368 = vmul.f32 %v344, %v359
  %v369 = vmul.f32 %v345, %v364
  %v370 = vadd.f32 %v366, %v367
  %v371 = vadd.f32 %v370, %v368
  %v372 = vadd.f32 %v371, %v369
  %v373 = vrot.slane %v372, 4
  %v374 = vadd.f32 %v372, %v373
  %v375 = vrot.slane %v374, 2
  %v376 = vadd.f32 %v374, %v375
  %v377 = vrot.slane %v376, 1
  %v378 = vadd.f32 %v376, %v377
  %380 = vset.pattern.permute.xlu0 0
  %381 = vperm.xlu0 %380, %v57
  %v382 = vpop.permute.xlu0 %381
  %v384 = vlaneseq
  %v385 = vshrl.u32 %v384, 7
  %v386 = vsub.s32 0, %v385
  %v387 = vrot.slane %v382, %v386
  %v388 = vadd.f32 %v378, %v387
  %389 = vst [vmem:[%s7] sm:$0x1] %v388
  // Predicated region
  $region30: #{simple_nn_forward.1} parent=0 // pred_check
    _
  $region31: #{simple_nn_forward.1} parent=0 // pred_check_branch
    %391 = sbr.rel (0) target = $region33
  $region32: #{simple_nn_forward.1} parent=0 // pred_region
    _
  $region33: #{simple_nn_forward.1} parent=0 // pred_fallthru
    _
  // Predicated region
  $region34: #{simple_nn_forward.1} parent=0 // pred_check
    _
  $region35: #{simple_nn_forward.1} parent=0 // pred_check_branch
    %393 = sbr.rel (0) target = $region37
  $region36: #{simple_nn_forward.1} parent=0 // pred_region
    _
  $region37: #{simple_nn_forward.1} parent=0 // pred_fallthru
    _

</llo_original>
